<compile_context>
chip_gen: v6e
topology: v6e:2x2x1
jax: 0.10.0
libtpu: 0.0.40
codegen_flags: <defaults>
</compile_context>

<pallas_src>
import functools

import jax
import jax.numpy as jnp
from jax.experimental import pallas as pl
from jax.experimental.pallas import tpu as pltpu


def _round_up(v, m):
    return ((v + m - 1) // m) * m


def _conv_bias_prelu_kernel(x_ref, w_ref, b_ref, a_ref, o_ref, *,
                            k, wp, m_out, mxu_dtype):
    """Fused Conv2d (stride 1, zero pad pre-applied) + bias + PReLU.

    Channel-on-sublane / flattened-spatial-on-lane layout (one batch element):
      x_ref: (Cin, L)          zero-padded image, flattened (Hp*Wp) + lane pad
      w_ref: (Cout, k*k*Cin)   conv weights, row-major over (dy, dx, ci)
      b_ref: (Cout, 1)         conv bias (VMEM, broadcast over lanes)
      a_ref: (1,)   [SMEM]     PReLU alpha (single shared scalar)
      o_ref: (Cout, M_out)     conv output on the flattened padded grid
    """
    x = x_ref[...]                                   # (Cin, L) — a few vregs
    w = w_ref[...]                                   # (Cout, k*k*Cin)
    if mxu_dtype is not None:                        # bf16 MXU path (v6e/v7x)
        x = x.astype(mxu_dtype)
        w = w.astype(mxu_dtype)

    # Implicit im2col: for tap (dy, dx) the contribution at flat output
    # position s = h*Wp + w is x[:, s + dy*Wp + dx].  Static lane-offset
    # slices (no reshape relayouts), stacked on sublanes -> one matmul, K=36.
    cols = jnp.concatenate(
        [x[:, dy * wp + dx: dy * wp + dx + m_out]
         for dy in range(k) for dx in range(k)],
        axis=0)                                      # (k*k*Cin, M_out)

    acc = jnp.dot(w, cols, preferred_element_type=jnp.float32)  # (Cout, M_out)
    acc = acc + b_ref[...]                           # (Cout, 1) lane broadcast

    alpha = a_ref[0]                                 # scalar from SMEM
    y = jnp.where(acc >= 0, acc, alpha * acc)        # PReLU (f32 math)
    o_ref[...] = y.astype(o_ref.dtype)               # lane-dense (16, 384) vst


def upscale_layer_forward(x_nchw, w_oihw, bias, alpha, scale, pad,
                          mxu_dtype=None):
    """Forward pass of UpscaleLayer. Input/output use PyTorch NCHW convention.

    mxu_dtype: set to jnp.bfloat16 on v6e/v7x to halve MXU passes / VMEM bytes
    (accumulation, bias and PReLU stay in f32).
    """
    N, Cin, H, W = x_nchw.shape
    Cout, _, k, _ = w_oihw.shape
    assert Cout == Cin * scale * scale

    Hp, Wp = H + 2 * pad, W + 2 * pad
    Ho, Wo = Hp - k + 1, Wp - k + 1
    Sp = Hp * Wp
    M_out = _round_up(Sp, 128)                 # lane-dense output width
    max_shift = (k - 1) * Wp + (k - 1)
    L = _round_up(M_out + max_shift, 128)      # every tap slice stays in bounds

    # NCHW already has channels leading per image: zero-pad spatial dims,
    # flatten them onto the lane axis, pad the lane axis to L.
    # TODO(synk): fold this zero-pad/flatten into the kernel via a strided DMA
    # into a zero-initialized VMEM scratch to drop one small HBM pass.
    x_pad = jnp.pad(x_nchw, ((0, 0), (0, 0), (pad, pad), (pad, pad)))
    x_flat = jnp.pad(x_pad.reshape(N, Cin, Sp), ((0, 0), (0, 0), (0, L - Sp)))

    # OIHW -> (Cout, k*k*Cin), row-major over (dy, dx, ci): matches the
    # in-kernel im2col row ordering.
    w_mat = jnp.transpose(w_oihw, (0, 2, 3, 1)).reshape(Cout, k * k * Cin)
    b2 = bias.reshape(Cout, 1).astype(jnp.float32)
    a1 = jnp.asarray(alpha, jnp.float32).reshape(1)

    kernel = functools.partial(_conv_bias_prelu_kernel,
                               k=k, wp=Wp, m_out=M_out, mxu_dtype=mxu_dtype)

    conv_flat = pl.pallas_call(
        kernel,
        out_shape=jax.ShapeDtypeStruct((N, Cout, M_out), x_nchw.dtype),
        grid=(N,),
        in_specs=[
            pl.BlockSpec((None, Cin, L), lambda n: (n, 0, 0)),
            pl.BlockSpec((Cout, k * k * Cin), lambda n: (0, 0)),
            pl.BlockSpec((Cout, 1), lambda n: (0, 0)),
            pl.BlockSpec(memory_space=pltpu.MemorySpace.SMEM),   # alpha scalar
        ],
        out_specs=pl.BlockSpec((None, Cout, M_out), lambda n: (n, 0, 0)),
        compiler_params=pltpu.CompilerParams(
            dimension_semantics=("parallel",)),
    )(x_flat, w_mat, b2, a1)

    # Crop the flat padded grid + PixelShuffle: one fused XLA copy pass.
    # (PReLU has a single scalar alpha, so applying it pre-shuffle is exact.)
    # TODO(synk): fuse this lane interleave into the kernel's output store
    # (strided lane writes) to avoid one HBM round trip of the output.
    r = scale
    conv = conv_flat[:, :, :Sp].reshape(N, Cout, Hp, Wp)[:, :, :Ho, :Wo]
    y = conv.reshape(N, Cin, r, r, Ho, Wo)
    y = jnp.transpose(y, (0, 1, 4, 2, 5, 3))            # N, C, Ho, r, Wo, r
    return y.reshape(N, Cin, Ho * r, Wo * r)            # NCHW output


def _reference_forward(x_nchw, w_oihw, bias, alpha, scale, pad):
    """Pure-JAX reference (XLA conv) reproducing the PyTorch forward."""
    N, Cin, H, W = x_nchw.shape
    conv = jax.lax.conv_general_dilated(
        x_nchw, w_oihw, window_strides=(1, 1),
        padding=((pad, pad), (pad, pad)),
        dimension_numbers=("NCHW", "OIHW", "NCHW"))
    conv = conv + bias[None, :, None, None]
    r = scale
    Ho, Wo = conv.shape[2], conv.shape[3]
    ps = conv.reshape(N, Cin, r, r, Ho, Wo)
    ps = jnp.transpose(ps, (0, 1, 4, 2, 5, 3)).reshape(N, Cin, Ho * r, Wo * r)
    return jnp.where(ps >= 0, ps, alpha * ps)


if __name__ == "__main__":
    # UpscaleLayer(in_channels=4, scaleFactor=2, k=3, p=1), input [2, 4, 16, 16]
    in_channels, scale, k, p = 4, 2, 3, 1
    N, H, W = 2, 16, 16
    c_out = in_channels * scale * scale

    key = jax.random.PRNGKey(0)
    kx, kw, kb = jax.random.split(key, 3)

    x = jax.random.normal(kx, (N, in_channels, H, W), dtype=jnp.float32)
    # Deterministic synthetic parameters (Conv2d weight OIHW, bias, PReLU alpha).
    fan_in = in_channels * k * k
    bound = 1.0 / float(fan_in) ** 0.5
    w = jax.random.uniform(kw, (c_out, in_channels, k, k),
                           minval=-bound, maxval=bound, dtype=jnp.float32)
    b = jax.random.uniform(kb, (c_out,), minval=-bound, maxval=bound,
                           dtype=jnp.float32)
    alpha = 0.25  # PyTorch PReLU default init

    ref = _reference_forward(x, w, b, alpha, scale, p)

    # f32 MXU path (default): exact to the XLA reference.
    out = upscale_layer_forward(x, w, b, alpha, scale, p)
    out = jax.block_until_ready(out)
    assert out.shape == (N, in_channels, H * scale, W * scale), out.shape
    assert jnp.allclose(out, ref, atol=1e-5, rtol=1e-5), \
        float(jnp.max(jnp.abs(out - ref)))

    # bf16 MXU operand path (v6e/v7x optimization): looser tolerance sanity check.
    out_bf16 = upscale_layer_forward(x, w, b, alpha, scale, p,
                                     mxu_dtype=jnp.bfloat16)
    out_bf16 = jax.block_until_ready(out_bf16)
    assert jnp.allclose(out_bf16, ref, atol=1e-1, rtol=1e-1), \
        float(jnp.max(jnp.abs(out_bf16 - ref)))

    print("KERNEL_OK")
</pallas_src>

<mosaic_0001>
module attributes {stable_mosaic.version = 11 : i64} {
  func.func @_conv_bias_prelu_kernel(%arg0: i32, %arg1: memref<1x4x512xf32, #tpu.memory_space<vmem>>, %arg2: memref<16x36xf32, #tpu.memory_space<vmem>>, %arg3: memref<16x1xf32, #tpu.memory_space<vmem>>, %arg4: memref<1xf32, #tpu.memory_space<smem>>, %arg5: memref<1x16x384xf32, #tpu.memory_space<vmem>>) attributes {dimension_semantics = [#tpu.dimension_semantics<parallel>], iteration_bounds = array<i64: 2>, scalar_prefetch = 0 : i64, scratch_operands = 0 : i64, tpu.core_type = #tpu.core_type<tc>, window_params = [{transform_indices = @transform_0, window_bounds = array<i64: 1, 4, 512>}, {pipeline_mode = #tpu.pipeline_mode<synchronous>, transform_indices = @transform_1, window_bounds = array<i64: 16, 36>}, {pipeline_mode = #tpu.pipeline_mode<synchronous>, transform_indices = @transform_2, window_bounds = array<i64: 16, 1>}, {transform_indices = @transform_3, window_bounds = array<i64: 1>}, {transform_indices = @transform_4, window_bounds = array<i64: 1, 16, 384>}]} {
    %c0 = arith.constant 0 : index
    %c0_0 = arith.constant 0 : index
    %c0_1 = arith.constant 0 : index
    %0 = vector.load %arg1[%c0, %c0_0, %c0_1] : memref<1x4x512xf32, #tpu.memory_space<vmem>>, vector<1x4x512xf32>
    %1 = vector.shape_cast %0 : vector<1x4x512xf32> to vector<4x512xf32>
    %c0_2 = arith.constant 0 : index
    %c0_3 = arith.constant 0 : index
    %2 = vector.load %arg2[%c0_2, %c0_3] : memref<16x36xf32, #tpu.memory_space<vmem>>, vector<16x36xf32>
    %3 = vector.extract_strided_slice %1 {offsets = [0, 0], sizes = [4, 384], strides = [1, 1]} : vector<4x512xf32> to vector<4x384xf32>
    %4 = vector.extract_strided_slice %1 {offsets = [0, 1], sizes = [4, 384], strides = [1, 1]} : vector<4x512xf32> to vector<4x384xf32>
    %5 = vector.extract_strided_slice %1 {offsets = [0, 2], sizes = [4, 384], strides = [1, 1]} : vector<4x512xf32> to vector<4x384xf32>
    %6 = vector.extract_strided_slice %1 {offsets = [0, 18], sizes = [4, 384], strides = [1, 1]} : vector<4x512xf32> to vector<4x384xf32>
    %7 = vector.extract_strided_slice %1 {offsets = [0, 19], sizes = [4, 384], strides = [1, 1]} : vector<4x512xf32> to vector<4x384xf32>
    %8 = vector.extract_strided_slice %1 {offsets = [0, 20], sizes = [4, 384], strides = [1, 1]} : vector<4x512xf32> to vector<4x384xf32>
    %9 = vector.extract_strided_slice %1 {offsets = [0, 36], sizes = [4, 384], strides = [1, 1]} : vector<4x512xf32> to vector<4x384xf32>
    %10 = vector.extract_strided_slice %1 {offsets = [0, 37], sizes = [4, 384], strides = [1, 1]} : vector<4x512xf32> to vector<4x384xf32>
    %11 = vector.extract_strided_slice %1 {offsets = [0, 38], sizes = [4, 384], strides = [1, 1]} : vector<4x512xf32> to vector<4x384xf32>
    %12 = tpu.concatenate %3, %4, %5, %6, %7, %8, %9, %10, %11 in 0 : vector<4x384xf32>, vector<4x384xf32>, vector<4x384xf32>, vector<4x384xf32>, vector<4x384xf32>, vector<4x384xf32>, vector<4x384xf32>, vector<4x384xf32>, vector<4x384xf32> -> vector<36x384xf32>
    %cst = arith.constant dense<0.000000e+00> : vector<16x384xf32>
    %13 = tpu.matmul %2, %12, %cst {dimension_numbers = #tpu.dot_dimension_numbers<[1], [0], [0], [1], [0, 0, 1, 1], [], []>} : vector<16x36xf32>, vector<36x384xf32>, vector<16x384xf32> -> vector<16x384xf32>
    %c0_4 = arith.constant 0 : index
    %c0_5 = arith.constant 0 : index
    %14 = vector.load %arg3[%c0_4, %c0_5] : memref<16x1xf32, #tpu.memory_space<vmem>>, vector<16x1xf32>
    %15 = vector.broadcast %14 : vector<16x1xf32> to vector<16x384xf32>
    %16 = arith.addf %13, %15 : vector<16x384xf32>
    %c0_6 = arith.constant 0 : index
    %17 = memref.load %arg4[%c0_6] : memref<1xf32, #tpu.memory_space<smem>>
    %cst_7 = arith.constant 0.000000e+00 : f32
    %18 = vector.broadcast %cst_7 : f32 to vector<16x384xf32>
    %19 = arith.cmpf oge, %16, %18 : vector<16x384xf32>
    %20 = vector.broadcast %17 : f32 to vector<16x384xf32>
    %21 = arith.mulf %20, %16 : vector<16x384xf32>
    %22 = arith.select %19, %16, %21 : vector<16x384xi1>, vector<16x384xf32>
    %c0_8 = arith.constant 0 : index
    %c0_9 = arith.constant 0 : index
    %c0_10 = arith.constant 0 : index
    %23 = vector.load %arg5[%c0_8, %c0_9, %c0_10] : memref<1x16x384xf32, #tpu.memory_space<vmem>>, vector<1x16x384xf32>
    %24 = vector.shape_cast %23 : vector<1x16x384xf32> to vector<16x384xf32>
    %25 = vector.shape_cast %22 : vector<16x384xf32> to vector<1x16x384xf32>
    tpu.vector_store %arg5[%c0_8, %c0_9, %c0_10], %25 {strides = array<i32>} : memref<1x16x384xf32, #tpu.memory_space<vmem>>, vector<1x16x384xf32>,
    return
  }
  func.func @transform_0(%arg0: i32) -> (i32, i32, i32) {
    %c0_i32 = arith.constant 0 : i32
    %c0_i32_0 = arith.constant 0 : i32
    %c0_i32_1 = arith.constant 0 : i32
    return %arg0, %c0_i32, %c0_i32_0 : i32, i32, i32
  }
  func.func @transform_1(%arg0: i32) -> (i32, i32) {
    %c0_i32 = arith.constant 0 : i32
    %c0_i32_0 = arith.constant 0 : i32
    %c0_i32_1 = arith.constant 0 : i32
    return %c0_i32, %c0_i32_0 : i32, i32
  }
  func.func @transform_2(%arg0: i32) -> (i32, i32) {
    %c0_i32 = arith.constant 0 : i32
    %c0_i32_0 = arith.constant 0 : i32
    %c0_i32_1 = arith.constant 0 : i32
    return %c0_i32, %c0_i32_0 : i32, i32
  }
  func.func @transform_3(%arg0: i32) -> i32 {
    %c0_i32 = arith.constant 0 : i32
    %c0_i32_0 = arith.constant 0 : i32
    return %c0_i32 : i32
  }
  func.func @transform_4(%arg0: i32) -> (i32, i32, i32) {
    %c0_i32 = arith.constant 0 : i32
    %c0_i32_0 = arith.constant 0 : i32
    %c0_i32_1 = arith.constant 0 : i32
    return %arg0, %c0_i32, %c0_i32_0 : i32, i32, i32
  }
}

</mosaic_0001>

<llo_original>
// kernel: tpu_custom_call.1
$region0: #{tpu_custom_call.1}
  #allocation0 [shape = 'u32[]', space=smem, size = 0x4, offset = 0x4, fixed_abs, tag = 'smem constant byte address 0x4 - core index']
  #allocation1 [shape = 'u32[144,128]{1,0:T(1,128)}', space=vmem, size = 0x12000, scoped, tag = 'internal scratch']
  #allocation2 [shape = 'f32[1]{0:T(128)S(6)}', space=smem, size = 0x200, scoped, tag = 'scoped memory for tpu_custom_call.1']
  %s0 = inlined_call_operand.hbm [shape: f32[2,4,512], index: 0, kind: input, shape index: {}]
  %s1 = inlined_call_operand.vmem [shape: f32[16,36], index: 1, kind: input, shape index: {}]
  %s2 = inlined_call_operand.vmem [shape: f32[16,1], index: 2, kind: input, shape index: {}]
  %s3 = inlined_call_operand.<no memory space> [shape: f32[1], index: 3, kind: input, shape index: {}]
  %s4 = inlined_call_operand.hbm [shape: f32[2,16,384], index: 4, kind: output, shape index: {}]
  %s5 = sld [smem:[#allocation0]]
  $region53: #{tpu_custom_call.1} parent=0
    _
  %s7 = ssub.s32 1, %s5
  %s8 = scalar_select 0, %s7, %s5
  %9 = sst [smem:[#allocation2]] %s3
  $region1: #{tpu_custom_call.1} parent=0
    #allocation3 [shape = 'u8[16384]{0}', space=vmem, size = 0x4000, scoped, tag = 'input window, operand 0']
    #allocation4 [shape = 's32[2]{0}', space=sflag, size = 0x8, scoped, tag = 'scoped memory for tpu_custom_call.1']
    #allocation5 [shape = 's32[2]{0}', space=sflag, size = 0x8, scoped, tag = 'scoped memory for tpu_custom_call.1']
    #allocation6 [shape = 'u8[49152]{0}', space=vmem, size = 0xc000, scoped, tag = 'output window, operand 0']
    %10 = vsyncpa [#allocation4], 0
    %s11 = scalar_lea.sflag [#allocation4], 1
    %12 = vsyncpa %s11, 0
    %13 = vsyncpa [#allocation5], 0
    %s14 = scalar_lea.sflag [#allocation5], 1
    %15 = vsyncpa %s14, 0
    loop: start=0, step=1, limit=4
    $region2: #{tpu_custom_call.1} parent=1 // loop_pre_header
      _
    $region3: #{tpu_custom_call.1} parent=1 // loop_header
      %s17 = sphi 0, %s21
      %p18 = scmp.ge.s32.totalorder %s17, 4
      %s27 = sphi 0, %s29
      %s30 = sphi 0, %s27
      %s31 = sphi 0, %s30
      %s47 = sphi 0, %s31
      %s51 = sphi 0, %s51
      %s53 = sphi 0, %s51
      %s54 = sphi 0, %s53
      %s68 = sphi 0, %s54
      %s72 = sphi 0, %s72
      %s74 = sphi 0, %s72
      %s75 = sphi 0, %s74
      %s89 = sphi 0, %s75
      %s93 = sphi 0, %s93
      %s95 = sphi 0, %s93
      %s96 = sphi 0, %s95
      %s110 = sphi 0, %s96
      %s116 = sphi 0, %s118
      %s119 = sphi 0, %s116
      %s120 = sphi 0, %s119
      %s136 = sphi 0, %s120
    $region4: #{tpu_custom_call.1} parent=1 // loop_header_branch
      %20 = sbr.rel (%p18) target = $region8
    $region5: #{tpu_custom_call.1} parent=1 // loop_body
      %s22 = ssub.s32 %s17, 1
      %s23 = ssub.s32 %s17, 2
      %s24 = sadd.s32 %s17, 1
      %s25 = ssub.s32 %s17, %s24
      %p26 = scmp.eq.s32.totalorder %s25, 0
      %s28 = sadd.s32 %s27, 1
      %s29 = scalar_select %p26, %s27, %s28
      %p32 = pneg %p26
      %p33 = scmp.eq.s32.totalorder %s17, 1
      %p34 = por %p32, %p33
      %p35 = scmp.ne.s32.totalorder %s27, %s30
      %p36 = scmp.eq.s32.totalorder %s17, 0
      %p37 = por %p35, %p36
      %p38 = scmp.ne.s32.totalorder %s27, %s30
      %p39 = scmp.eq.s32.totalorder %s22, 1
      %p40 = por %p38, %p39
      %p41 = scmp.ne.s32.totalorder %s30, %s31
      %p42 = scmp.eq.s32.totalorder %s22, 0
      %p43 = por %p41, %p42
      %p44 = scmp.ne.s32.totalorder %s30, %s31
      %p45 = scmp.eq.s32.totalorder %s23, 1
      %p46 = por %p44, %p45
      %p48 = scmp.ne.s32.totalorder %s31, %s47
      %p49 = scmp.eq.s32.totalorder %s23, 0
      %p50 = por %p48, %p49
      %s52 = sadd.s32 %s51, 1
      %p55 = scmp.eq.s32.totalorder %s17, 1
      %p56 = scmp.ne.s32.totalorder %s51, %s53
      %p57 = scmp.eq.s32.totalorder %s17, 0
      %p58 = por %p56, %p57
      %p59 = scmp.ne.s32.totalorder %s51, %s53
      %p60 = scmp.eq.s32.totalorder %s22, 1
      %p61 = por %p59, %p60
      %p62 = scmp.ne.s32.totalorder %s53, %s54
      %p63 = scmp.eq.s32.totalorder %s22, 0
      %p64 = por %p62, %p63
      %p65 = scmp.ne.s32.totalorder %s53, %s54
      %p66 = scmp.eq.s32.totalorder %s23, 1
      %p67 = por %p65, %p66
      %p69 = scmp.ne.s32.totalorder %s54, %s68
      %p70 = scmp.eq.s32.totalorder %s23, 0
      %p71 = por %p69, %p70
      %s73 = sadd.s32 %s72, 1
      %p76 = scmp.eq.s32.totalorder %s17, 1
      %p77 = scmp.ne.s32.totalorder %s72, %s74
      %p78 = scmp.eq.s32.totalorder %s17, 0
      %p79 = por %p77, %p78
      %p80 = scmp.ne.s32.totalorder %s72, %s74
      %p81 = scmp.eq.s32.totalorder %s22, 1
      %p82 = por %p80, %p81
      %p83 = scmp.ne.s32.totalorder %s74, %s75
      %p84 = scmp.eq.s32.totalorder %s22, 0
      %p85 = por %p83, %p84
      %p86 = scmp.ne.s32.totalorder %s74, %s75
      %p87 = scmp.eq.s32.totalorder %s23, 1
      %p88 = por %p86, %p87
      %p90 = scmp.ne.s32.totalorder %s75, %s89
      %p91 = scmp.eq.s32.totalorder %s23, 0
      %p92 = por %p90, %p91
      %s94 = sadd.s32 %s93, 1
      %p97 = scmp.eq.s32.totalorder %s17, 1
      %p98 = scmp.ne.s32.totalorder %s93, %s95
      %p99 = scmp.eq.s32.totalorder %s17, 0
      %p100 = por %p98, %p99
      %p101 = scmp.ne.s32.totalorder %s93, %s95
      %p102 = scmp.eq.s32.totalorder %s22, 1
      %p103 = por %p101, %p102
      %p104 = scmp.ne.s32.totalorder %s95, %s96
      %p105 = scmp.eq.s32.totalorder %s22, 0
      %p106 = por %p104, %p105
      %p107 = scmp.ne.s32.totalorder %s95, %s96
      %p108 = scmp.eq.s32.totalorder %s23, 1
      %p109 = por %p107, %p108
      %p111 = scmp.ne.s32.totalorder %s96, %s110
      %p112 = scmp.eq.s32.totalorder %s23, 0
      %p113 = por %p111, %p112
      %s114 = ssub.s32 %s17, %s24
      %p115 = scmp.eq.s32.totalorder %s114, 0
      %s117 = sadd.s32 %s116, 1
      %s118 = scalar_select %p115, %s116, %s117
      %p121 = pneg %p115
      %p122 = scmp.eq.s32.totalorder %s17, 1
      %p123 = por %p121, %p122
      %p124 = scmp.ne.s32.totalorder %s116, %s119
      %p125 = scmp.eq.s32.totalorder %s17, 0
      %p126 = por %p124, %p125
      %p127 = scmp.ne.s32.totalorder %s116, %s119
      %p128 = scmp.eq.s32.totalorder %s22, 1
      %p129 = por %p127, %p128
      %p130 = scmp.ne.s32.totalorder %s119, %s120
      %p131 = scmp.eq.s32.totalorder %s22, 0
      %p132 = por %p130, %p131
      %p133 = scmp.ne.s32.totalorder %s119, %s120
      %p134 = scmp.eq.s32.totalorder %s23, 1
      %p135 = por %p133, %p134
      %p137 = scmp.ne.s32.totalorder %s120, %s136
      %p138 = scmp.eq.s32.totalorder %s23, 0
      %p139 = por %p137, %p138
      %p140 = scmp.le.s32.totalorder 1, %s17
      %p141 = scmp.lt.s32.totalorder %s17, 3
      %p142 = pnand %p140, %p141
      %p143 = pneg %p142
      // Predicated region
      $region9: #{tpu_custom_call.1} parent=5 // pred_check
        _
      $region10: #{tpu_custom_call.1} parent=5 // pred_check_branch
        %145 = sbr.rel (%p142) target = $region12
      $region11: #{tpu_custom_call.1} parent=5 // pred_region
        %s146 = ssub.s32 %s17, 1
        // Predicated region
        $region13: #{tpu_custom_call.1} parent=11 // pred_check
          %p147 = pneg %p64
        $region14: #{tpu_custom_call.1} parent=11 // pred_check_branch
          %149 = sbr.rel (%p147) target = $region16
        $region15: #{tpu_custom_call.1} parent=11 // pred_region
          _
        $region16: #{tpu_custom_call.1} parent=11 // pred_fallthru
          _
        // Predicated region
        $region17: #{tpu_custom_call.1} parent=11 // pred_check
          %p150 = pneg %p85
        $region18: #{tpu_custom_call.1} parent=11 // pred_check_branch
          %152 = sbr.rel (%p150) target = $region20
        $region19: #{tpu_custom_call.1} parent=11 // pred_region
          _
        $region20: #{tpu_custom_call.1} parent=11 // pred_fallthru
          _
        // Predicated region
        $region21: #{tpu_custom_call.1} parent=11 // pred_check
          %p153 = pneg %p106
        $region22: #{tpu_custom_call.1} parent=11 // pred_check_branch
          %155 = sbr.rel (%p153) target = $region24
        $region23: #{tpu_custom_call.1} parent=11 // pred_region
          _
        $region24: #{tpu_custom_call.1} parent=11 // pred_fallthru
          _
      $region12: #{tpu_custom_call.1} parent=5 // pred_fallthru
        _
      %p156 = scmp.lt.s32.totalorder %s17, 2
      // Predicated region
      $region25: #{tpu_custom_call.1} parent=5 // pred_check
        %p157 = pneg %p156
      $region26: #{tpu_custom_call.1} parent=5 // pred_check_branch
        %159 = sbr.rel (%p157) target = $region28
      $region27: #{tpu_custom_call.1} parent=5 // pred_region
        // Predicated region
        $region29: #{tpu_custom_call.1} parent=27 // pred_check
          %p160 = pneg %p37
        $region30: #{tpu_custom_call.1} parent=27 // pred_check_branch
          %162 = sbr.rel (%p160) target = $region32
        $region31: #{tpu_custom_call.1} parent=27 // pred_region
          %s163 = sand.u32 %s27, 1
          %s164 = scalar_lea.sflag [#allocation4], %s163
          %s165 = sand.u32 %s27, 1
          %s166 = smul.addr %s165, 16
          %s167 = scalar_lea.vmem [#allocation3], %s166
          %s169 = ssub.s32 256, 256
          %170 = vsyncadd %s164, %s169
          %s171 = smul.addr %s17, 4
          %s172 = smul.addr %s171, 64
          %s173 = scalar_lea.hbm %s0, %s172
          %s175 = sshll.u32 %s167, 4
          %s176 = int_to_ptr.vmem [resolvable:$true] %s175
          %178 = dma.hbm_to_vmem [thread:$0]  %s173, 256, %s176, %s164
        $region32: #{tpu_custom_call.1} parent=27 // pred_fallthru
          _
      $region28: #{tpu_custom_call.1} parent=5 // pred_fallthru
        _
      %p179 = scmp.le.s32.totalorder 1, %s17
      %p180 = scmp.lt.s32.totalorder %s17, 3
      %p181 = pnand %p179, %p180
      %p182 = pneg %p181
      // Predicated region
      $region33: #{tpu_custom_call.1} parent=5 // pred_check
        _
      $region34: #{tpu_custom_call.1} parent=5 // pred_check_branch
        %184 = sbr.rel (%p181) target = $region36
      $region35: #{tpu_custom_call.1} parent=5 // pred_region
        %s185 = ssub.s32 %s17, 1
        %s186 = sand.u32 %s30, 1
        %s187 = scalar_lea.sflag [#allocation4], %s186
        %s188 = sand.u32 %s30, 1
        %s189 = smul.addr %s188, 16
        %s190 = scalar_lea.vmem [#allocation3], %s189
        // Predicated region
        $region37: #{tpu_custom_call.1} parent=35 // pred_check
          %p191 = pneg %p43
        $region38: #{tpu_custom_call.1} parent=35 // pred_check_branch
          %193 = sbr.rel (%p191) target = $region40
        $region39: #{tpu_custom_call.1} parent=35 // pred_region
          %194 = dma.done %s187, 256
        $region40: #{tpu_custom_call.1} parent=35 // pred_fallthru
          _
        %s195 = sand.u32 %s30, 1
        %s196 = scalar_lea.sflag [#allocation4], %s195
        %s197 = sand.u32 %s30, 1
        %s198 = smul.addr %s197, 16
        %s199 = scalar_lea.vmem [#allocation3], %s198
        %p200 = pneg %p43
        %p201 = pneg %p40
        %p202 = pneg %p64
        %p203 = pneg %p61
        %p204 = pneg %p85
        %p205 = pneg %p82
        %p206 = pneg %p106
        %p207 = pneg %p103
        %p208 = pneg %p132
        %p209 = pneg %p129
        %s210 = sand.u32 %s119, 1
        %s211 = scalar_lea.sflag [#allocation5], %s210
        %s212 = sand.u32 %s119, 1
        %s213 = smul.addr %s212, 48
        %s214 = scalar_lea.vmem [#allocation6], %s213
        %v215 = vld [vmem:[%s190] sm:$0xff]
        %v216 = vld [vmem:[%s190 + $0x8] sm:$0xff]
        %v217 = vld [vmem:[%s1] sm:$0xff]
        %v218 = vld [vmem:[%s1 + $0x8] sm:$0xff]
        %v221 = vcombine.high %v215, %v215
        %v223 = vcombine.low %v215, %v215
        %v224 = vcombine.low %v216, %v216
        %225 = vrot.lane.b32.xlu0 %v223, 127
        %v226 = vpop.permute.xlu0 %225
        %227 = vrot.lane.b32.xlu0 %v215, 127
        %v228 = vpop.permute.xlu0 %227
        %229 = vrot.lane.b32.xlu0 %v224, 127
        %v230 = vpop.permute.xlu0 %229
        %231 = vrot.lane.b32.xlu0 %v216, 127
        %v232 = vpop.permute.xlu0 %231
        %vm233 = vcmask 1039360
        %v234 = vsel %vm233, %v226, %v228
        %v235 = vsel %vm233, %v228, %v230
        %v236 = vsel %vm233, %v230, %v232
        %v240 = vcombine.high %v216, %v216
        %241 = vrot.lane.b32.xlu0 %v215, 126
        %v242 = vpop.permute.xlu0 %241
        %243 = vrot.lane.b32.xlu0 %v221, 126
        %v244 = vpop.permute.xlu0 %243
        %245 = vrot.lane.b32.xlu0 %v216, 126
        %v246 = vpop.permute.xlu0 %245
        %247 = vrot.lane.b32.xlu0 %v240, 126
        %v248 = vpop.permute.xlu0 %247
        %vm249 = vcmask 1031168
        %v250 = vsel %vm249, %v242, %v244
        %v251 = vsel %vm249, %v244, %v246
        %v252 = vsel %vm249, %v246, %v248
        %256 = vrot.lane.b32.xlu0 %v223, 110
        %v257 = vpop.permute.xlu0 %256
        %258 = vrot.lane.b32.xlu0 %v215, 110
        %v259 = vpop.permute.xlu0 %258
        %260 = vrot.lane.b32.xlu0 %v224, 110
        %v261 = vpop.permute.xlu0 %260
        %262 = vrot.lane.b32.xlu0 %v216, 110
        %v263 = vpop.permute.xlu0 %262
        %vm264 = vcmask 900096
        %v265 = vsel %vm264, %v257, %v259
        %v266 = vsel %vm264, %v259, %v261
        %v267 = vsel %vm264, %v261, %v263
        %271 = vrot.lane.b32.xlu0 %v215, 109
        %v272 = vpop.permute.xlu0 %271
        %273 = vrot.lane.b32.xlu0 %v221, 109
        %v274 = vpop.permute.xlu0 %273
        %275 = vrot.lane.b32.xlu0 %v216, 109
        %v276 = vpop.permute.xlu0 %275
        %277 = vrot.lane.b32.xlu0 %v240, 109
        %v278 = vpop.permute.xlu0 %277
        %vm279 = vcmask 891904
        %v280 = vsel %vm279, %v272, %v274
        %v281 = vsel %vm279, %v274, %v276
        %v282 = vsel %vm279, %v276, %v278
        %286 = vrot.lane.b32.xlu0 %v223, 108
        %v287 = vpop.permute.xlu0 %286
        %288 = vrot.lane.b32.xlu0 %v215, 108
        %v289 = vpop.permute.xlu0 %288
        %290 = vrot.lane.b32.xlu0 %v224, 108
        %v291 = vpop.permute.xlu0 %290
        %292 = vrot.lane.b32.xlu0 %v216, 108
        %v293 = vpop.permute.xlu0 %292
        %vm294 = vcmask 883712
        %v295 = vsel %vm294, %v287, %v289
        %v296 = vsel %vm294, %v289, %v291
        %v297 = vsel %vm294, %v291, %v293
        %301 = vrot.lane.b32.xlu0 %v215, 92
        %v302 = vpop.permute.xlu0 %301
        %303 = vrot.lane.b32.xlu0 %v221, 92
        %v304 = vpop.permute.xlu0 %303
        %305 = vrot.lane.b32.xlu0 %v216, 92
        %v306 = vpop.permute.xlu0 %305
        %307 = vrot.lane.b32.xlu0 %v240, 92
        %v308 = vpop.permute.xlu0 %307
        %vm309 = vcmask 752640
        %v310 = vsel %vm309, %v302, %v304
        %v311 = vsel %vm309, %v304, %v306
        %v312 = vsel %vm309, %v306, %v308
        %316 = vrot.lane.b32.xlu0 %v223, 91
        %v317 = vpop.permute.xlu0 %316
        %318 = vrot.lane.b32.xlu0 %v215, 91
        %v319 = vpop.permute.xlu0 %318
        %320 = vrot.lane.b32.xlu0 %v224, 91
        %v321 = vpop.permute.xlu0 %320
        %322 = vrot.lane.b32.xlu0 %v216, 91
        %v323 = vpop.permute.xlu0 %322
        %vm324 = vcmask 744448
        %v325 = vsel %vm324, %v317, %v319
        %v326 = vsel %vm324, %v319, %v321
        %v327 = vsel %vm324, %v321, %v323
        %331 = vrot.lane.b32.xlu0 %v215, 90
        %v332 = vpop.permute.xlu0 %331
        %333 = vrot.lane.b32.xlu0 %v221, 90
        %v334 = vpop.permute.xlu0 %333
        %335 = vrot.lane.b32.xlu0 %v216, 90
        %v336 = vpop.permute.xlu0 %335
        %337 = vrot.lane.b32.xlu0 %v240, 90
        %v338 = vpop.permute.xlu0 %337
        %vm339 = vcmask 736256
        %v340 = vsel %vm339, %v332, %v334
        %v341 = vsel %vm339, %v334, %v336
        %v342 = vsel %vm339, %v336, %v338
        %vm343 = vcmask 1043456
        %v344 = vsel %vm343, %v215, %v234
        %v345 = vsel %vm343, %v221, %v235
        %v346 = vsel %vm343, %v216, %v236
        %v347 = vsel %vm343, %v250, %v265
        %v348 = vsel %vm343, %v251, %v266
        %v349 = vsel %vm343, %v252, %v267
        %v350 = vsel %vm343, %v280, %v295
        %v351 = vsel %vm343, %v281, %v296
        %v352 = vsel %vm343, %v282, %v297
        %v353 = vsel %vm343, %v310, %v325
        %v354 = vsel %vm343, %v311, %v326
        %v355 = vsel %vm343, %v312, %v327
        %v356 = vld [vmem:[%s2] sm:$0xff]
        %v357 = vld [vmem:[%s2 + $0x8] sm:$0xff]
        %359 = vset.pattern.permute.xlu0 0
        %360 = vperm.xlu0 %359, %v356
        %v361 = vpop.permute.xlu0 %360
        %364 = vset.pattern.permute.xlu0 0
        %365 = vperm.xlu0 %364, %v357
        %v366 = vpop.permute.xlu0 %365
        %vm368 = vcmask 293888
        %v370 = vsel %vm368, %v217, 0
        %v373 = vsel %vm368, %v218, 0
        %v375 = vsel %vm343, %v340, 0
        %v377 = vsel %vm343, %v341, 0
        %v379 = vsel %vm343, %v342, 0
        %381 = vmatprep.subr.mxu0 0.0
        %382 = vmatpush1.msra.mxu0 0.0
        %383 = vmatprep.subr.mxu0 0.0
        %384 = vmatpush1.msra.mxu0 0.0
        %385 = vmatprep.subr.mxu0 0.0
        %386 = vmatpush1.msra.mxu0 0.0
        %387 = vmatprep.subr.mxu0 0.0
        %388 = vmatpush1.msra.mxu0 0.0
        %389 = vmatprep.subr.mxu0 0.0
        %390 = vmatpush1.msra.mxu0 0.0
        %391 = vmatprep.subr.mxu0 0.0
        %392 = vmatpush1.msra.mxu0 0.0
        %393 = vmatprep.subr.mxu0 0.0
        %394 = vmatpush1.msra.mxu0 0.0
        %395 = vmatprep.subr.mxu0 0.0
        %396 = vmatpush1.msra.mxu0 0.0
        %397 = vmatprep.subr.mxu0 0.0
        %398 = vmatpush1.msra.mxu0 0.0
        %399 = vmatprep.subr.mxu0 0.0
        %400 = vmatpush1.msra.mxu0 0.0
        %401 = vmatprep.subr.mxu0 0.0
        %402 = vmatpush1.msra.mxu0 0.0
        %403 = vmatprep.subr.mxu0 %v377
        %404 = vmatpush1.msra.mxu0 %v375
        %405 = vmatprep.subr.mxu0 %v354
        %406 = vmatpush1.msra.mxu0 %v353
        %407 = vmatprep.subr.mxu0 %v351
        %408 = vmatpush1.msra.mxu0 %v350
        %409 = vmatprep.subr.mxu0 %v348
        %410 = vmatpush1.msra.mxu0 %v347
        %411 = vmatprep.subr.mxu0 %v345
        %412 = vmatpush1.msra.mxu0 %v344
        %413 = vmatprep.subr.mxu0 0.0
        %414 = vmatpush2.msra.mxu0 0.0
        %415 = vmatprep.subr.mxu0 0.0
        %416 = vmatpush2.msra.mxu0 0.0
        %417 = vmatprep.subr.mxu0 0.0
        %418 = vmatpush2.msra.mxu0 0.0
        %419 = vmatprep.subr.mxu0 0.0
        %420 = vmatpush2.msra.mxu0 0.0
        %421 = vmatprep.subr.mxu0 0.0
        %422 = vmatpush2.msra.mxu0 0.0
        %423 = vmatprep.subr.mxu0 0.0
        %424 = vmatpush2.msra.mxu0 0.0
        %425 = vmatprep.subr.mxu0 0.0
        %426 = vmatpush2.msra.mxu0 0.0
        %427 = vmatprep.subr.mxu0 0.0
        %428 = vmatpush2.msra.mxu0 0.0
        %429 = vmatprep.subr.mxu0 0.0
        %430 = vmatpush2.msra.mxu0 0.0
        %431 = vmatprep.subr.mxu0 0.0
        %432 = vmatpush2.msra.mxu0 0.0
        %433 = vmatprep.subr.mxu0 0.0
        %434 = vmatpush2.msra.mxu0 0.0
        %435 = vmatprep.subr.mxu0 0.0
        %436 = vmatpush2.msra.mxu0 0.0
        %437 = vmatprep.subr.mxu0 0.0
        %438 = vmatpush2.msra.mxu0 0.0
        %439 = vmatprep.subr.mxu0 0.0
        %440 = vmatpush2.msra.mxu0 0.0
        %441 = vmatprep.subr.mxu0 0.0
        %442 = vmatpush2.msra.mxu0 0.0
        %443 = vmatprep.subr.mxu0 0.0
        %444 = vmatpush2.msra.mxu0 0.0
        %445 = vmatprep.mubr.f32.mxu0 0.0
        %446 = vmatmul.mubr.f32.gmra.mxu0 %v370
        %v447 = vpop.f32.mrf.mxu0
        %v448 = vadd.f32 %v361, %v447
        %v449 = vpop.f32.mrf.mxu0
        %v450 = vadd.f32 %v361, %v449
        %451 = vmatprep.mubr.f32.mxu0 0.0
        %452 = vmatmul.mubr.f32.gmra.mxu0 %v373
        %v453 = vpop.f32.mrf.mxu0
        %v454 = vadd.f32 %v366, %v453
        %v455 = vpop.f32.mrf.mxu0
        %v456 = vadd.f32 %v366, %v455
        %457 = vdwg.mxu0
        %458 = vmatprep.subr.mxu0 0.0
        %459 = vmatpush1.msra.mxu0 0.0
        %460 = vmatprep.subr.mxu0 0.0
        %461 = vmatpush1.msra.mxu0 0.0
        %462 = vmatprep.subr.mxu0 0.0
        %463 = vmatpush1.msra.mxu0 0.0
        %464 = vmatprep.subr.mxu0 0.0
        %465 = vmatpush1.msra.mxu0 0.0
        %466 = vmatprep.subr.mxu0 0.0
        %467 = vmatpush1.msra.mxu0 0.0
        %468 = vmatprep.subr.mxu0 0.0
        %469 = vmatpush1.msra.mxu0 0.0
        %470 = vmatprep.subr.mxu0 0.0
        %471 = vmatpush1.msra.mxu0 0.0
        %472 = vmatprep.subr.mxu0 0.0
        %473 = vmatpush1.msra.mxu0 0.0
        %474 = vmatprep.subr.mxu0 0.0
        %475 = vmatpush1.msra.mxu0 0.0
        %476 = vmatprep.subr.mxu0 0.0
        %477 = vmatpush1.msra.mxu0 0.0
        %478 = vmatprep.subr.mxu0 0.0
        %479 = vmatpush1.msra.mxu0 0.0
        %480 = vmatprep.subr.mxu0 0.0
        %481 = vmatpush1.msra.mxu0 %v379
        %482 = vmatprep.subr.mxu0 0.0
        %483 = vmatpush1.msra.mxu0 %v355
        %484 = vmatprep.subr.mxu0 0.0
        %485 = vmatpush1.msra.mxu0 %v352
        %486 = vmatprep.subr.mxu0 0.0
        %487 = vmatpush1.msra.mxu0 %v349
        %488 = vmatprep.subr.mxu0 0.0
        %489 = vmatpush1.msra.mxu0 %v346
        %490 = vmatprep.subr.mxu0 0.0
        %491 = vmatpush2.msra.mxu0 0.0
        %492 = vmatprep.subr.mxu0 0.0
        %493 = vmatpush2.msra.mxu0 0.0
        %494 = vmatprep.subr.mxu0 0.0
        %495 = vmatpush2.msra.mxu0 0.0
        %496 = vmatprep.subr.mxu0 0.0
        %497 = vmatpush2.msra.mxu0 0.0
        %498 = vmatprep.subr.mxu0 0.0
        %499 = vmatpush2.msra.mxu0 0.0
        %500 = vmatprep.subr.mxu0 0.0
        %501 = vmatpush2.msra.mxu0 0.0
        %502 = vmatprep.subr.mxu0 0.0
        %503 = vmatpush2.msra.mxu0 0.0
        %504 = vmatprep.subr.mxu0 0.0
        %505 = vmatpush2.msra.mxu0 0.0
        %506 = vmatprep.subr.mxu0 0.0
        %507 = vmatpush2.msra.mxu0 0.0
        %508 = vmatprep.subr.mxu0 0.0
        %509 = vmatpush2.msra.mxu0 0.0
        %510 = vmatprep.subr.mxu0 0.0
        %511 = vmatpush2.msra.mxu0 0.0
        %512 = vmatprep.subr.mxu0 0.0
        %513 = vmatpush2.msra.mxu0 0.0
        %514 = vmatprep.subr.mxu0 0.0
        %515 = vmatpush2.msra.mxu0 0.0
        %516 = vmatprep.subr.mxu0 0.0
        %517 = vmatpush2.msra.mxu0 0.0
        %518 = vmatprep.subr.mxu0 0.0
        %519 = vmatpush2.msra.mxu0 0.0
        %520 = vmatprep.subr.mxu0 0.0
        %521 = vmatpush2.msra.mxu0 0.0
        %522 = vmatprep.mubr.f32.mxu0 0.0
        %523 = vmatmul.mubr.f32.gmra.mxu0 %v370
        %v524 = vpop.f32.mrf.mxu0
        %v525 = vadd.f32 %v361, %v524
        %v526 = vpop.f32.mrf.mxu0
        %527 = vmatprep.mubr.f32.mxu0 0.0
        %528 = vmatmul.mubr.f32.gmra.mxu0 %v373
        %v529 = vpop.f32.mrf.mxu0
        %v530 = vadd.f32 %v366, %v529
        %v531 = vpop.f32.mrf.mxu0
        %532 = vdwg.mxu0
        %s533 = sld [smem:[#allocation2]]
        %vm534 = vcmp.ge.f32.partialorder %v448, 0.0
        %vm535 = vcmp.ge.f32.partialorder %v450, 0.0
        %vm536 = vcmp.ge.f32.partialorder %v525, 0.0
        %vm537 = vcmp.ge.f32.partialorder %v454, 0.0
        %vm538 = vcmp.ge.f32.partialorder %v456, 0.0
        %vm539 = vcmp.ge.f32.partialorder %v530, 0.0
        %v540 = vstv %s533
        %v541 = vmul.f32 %v540, %v448
        %v542 = vmul.f32 %v540, %v450
        %v543 = vmul.f32 %v540, %v525
        %v544 = vmul.f32 %v540, %v454
        %v545 = vmul.f32 %v540, %v456
        %v546 = vmul.f32 %v540, %v530
        %v547 = vsel %vm534, %v448, %v541
        %v548 = vsel %vm535, %v450, %v542
        %v549 = vsel %vm536, %v525, %v543
        %v550 = vsel %vm537, %v454, %v544
        %v551 = vsel %vm538, %v456, %v545
        %v552 = vsel %vm539, %v530, %v546
        %553 = vst [vmem:[%s214] sm:$0xff] %v547
        %554 = vst [vmem:[%s214 + $0x8] sm:$0xff] %v548
        %555 = vst [vmem:[%s214 + $0x10] sm:$0xff] %v549
        %556 = vst [vmem:[%s214 + $0x18] sm:$0xff] %v550
        %557 = vst [vmem:[%s214 + $0x20] sm:$0xff] %v551
        %558 = vst [vmem:[%s214 + $0x28] sm:$0xff] %v552
        %s559 = sand.u32 %s119, 1
        %s560 = scalar_lea.sflag [#allocation5], %s559
        %s561 = sand.u32 %s119, 1
        %s562 = smul.addr %s561, 48
        %s563 = scalar_lea.vmem [#allocation6], %s562
        // Predicated region
        $region41: #{tpu_custom_call.1} parent=35 // pred_check
          %p564 = pneg %p129
        $region42: #{tpu_custom_call.1} parent=35 // pred_check_branch
          %566 = sbr.rel (%p564) target = $region44
        $region43: #{tpu_custom_call.1} parent=35 // pred_region
          %s568 = ssub.s32 768, 768
          %569 = vsyncadd %s560, %s568
          %s570 = smul.addr %s22, 6
          %s571 = smul.addr %s570, 128
          %s572 = scalar_lea.hbm %s4, %s571
          %s573 = sshll.u32 %s563, 4
          %s574 = int_to_ptr.vmem [resolvable:$true] %s573
          %579 = dma.vmem_to_hbm [thread:$0]  %s574, 768, %s572, %s560, 384, 384, 24
        $region44: #{tpu_custom_call.1} parent=35 // pred_fallthru
          _
      $region36: #{tpu_custom_call.1} parent=5 // pred_fallthru
        _
      %p580 = scmp.le.s32.totalorder 2, %s17
      // Predicated region
      $region45: #{tpu_custom_call.1} parent=5 // pred_check
        %p581 = pneg %p580
      $region46: #{tpu_custom_call.1} parent=5 // pred_check_branch
        %583 = sbr.rel (%p581) target = $region48
      $region47: #{tpu_custom_call.1} parent=5 // pred_region
        %s584 = ssub.s32 %s17, 2
        // Predicated region
        $region49: #{tpu_custom_call.1} parent=47 // pred_check
          %p585 = pneg %p135
        $region50: #{tpu_custom_call.1} parent=47 // pred_check_branch
          %587 = sbr.rel (%p585) target = $region52
        $region51: #{tpu_custom_call.1} parent=47 // pred_region
          %s588 = sand.u32 %s120, 1
          %s589 = scalar_lea.sflag [#allocation5], %s588
          %s590 = sand.u32 %s120, 1
          %s591 = smul.addr %s590, 48
          %s592 = scalar_lea.vmem [#allocation6], %s591
          %593 = dma.done %s589, 768
        $region52: #{tpu_custom_call.1} parent=47 // pred_fallthru
          _
      $region48: #{tpu_custom_call.1} parent=5 // pred_fallthru
        _
    $region6: #{tpu_custom_call.1} parent=1 // loop_footer
      %s21 = sadd.s32 1, %s17
    $region7: #{tpu_custom_call.1} parent=1 // loop_footer_branch
      %16 = sbr.rel target = $region3
    $region8: #{tpu_custom_call.1} parent=1 // loop_exit
      _
    %594 = vsyncpa [#allocation4], 1
    %s595 = scalar_lea.sflag [#allocation4], 1
    %596 = vsyncpa %s595, 1
    %597 = vsyncpa [#allocation5], 1
    %s598 = scalar_lea.sflag [#allocation5], 1
    %599 = vsyncpa %s598, 1

</llo_original>
